<compile_context>
chip_gen: v5e
topology: v5e:2x2
jax: 0.10.0
libtpu: 0.0.40
codegen_flags: <defaults>
</compile_context>

<pallas_src>
import jax
import jax.numpy as jnp
from jax.experimental import pallas as pl
from jax.experimental.pallas import tpu as pltpu

EPS = 1e-5  # PyTorch nn.LayerNorm default eps


def _layernorm(v, gamma, beta):
    mean = jnp.mean(v, axis=-1, keepdims=True)
    var = jnp.mean((v - mean) ** 2, axis=-1, keepdims=True)
    return (v - mean) * jax.lax.rsqrt(var + EPS) * gamma + beta


# ----------------------------------------------------------------------------
# Kernel 1: hoisted input projection  pre_x = LNx(x @ Wx + bx)
# ----------------------------------------------------------------------------
def _proj_ln_kernel(x_ref, wx_ref, bx_ref, g_ref, b_ref, o_ref):
    pre = jnp.dot(x_ref[...], wx_ref[...],
                  preferred_element_type=jnp.float32) + bx_ref[...]
    o_ref[...] = _layernorm(pre, g_ref[...], b_ref[...]).astype(o_ref.dtype)


def _input_projection(x_rows, wx, bx, gx, bgx, row_block=256):
    """x_rows: (R, D) -> (R, 4H) = LNx(x @ Wx + bx), one big tiled GEMM."""
    R, D = x_rows.shape
    G = wx.shape[1]
    RB = min(row_block, R)                      # R is already a multiple of 8
    R_pad = pl.cdiv(R, RB) * RB
    if R_pad != R:
        x_rows = jnp.pad(x_rows, ((0, R_pad - R), (0, 0)))

    out = pl.pallas_call(
        _proj_ln_kernel,
        out_shape=jax.ShapeDtypeStruct((R_pad, G), jnp.float32),
        grid_spec=pltpu.PrefetchScalarGridSpec(
            num_scalar_prefetch=0,
            grid=(R_pad // RB,),
            in_specs=[
                pl.BlockSpec((RB, D), lambda r: (r, 0)),   # x row-chunk
                pl.BlockSpec((D, G), lambda r: (0, 0)),    # Wx (resident)
                pl.BlockSpec((1, G), lambda r: (0, 0)),    # bx
                pl.BlockSpec((1, G), lambda r: (0, 0)),    # LNx gamma
                pl.BlockSpec((1, G), lambda r: (0, 0)),    # LNx beta
            ],
            out_specs=pl.BlockSpec((RB, G), lambda r: (r, 0)),
        ),
        compiler_params=pltpu.CompilerParams(
            dimension_semantics=("parallel",),
        ),
    )(x_rows, wx, bx, gx, bgx)
    return out[:R]


# ----------------------------------------------------------------------------
# Kernel 2: the recurrence.  grid = (direction, time-chunk)
# ----------------------------------------------------------------------------
def _recurrent_kernel(prex_ref, wh_ref, bh_ref, gh_ref, bgh_ref, gc_ref, bgc_ref,
                      out_ref, h_scr, c_scr):
    d = pl.program_id(0)          # 0 = forward, 1 = backward
    c = pl.program_id(1)          # time-chunk index (within this direction)

    @pl.when(c == 0)
    def _():
        h_scr[...] = jnp.zeros_like(h_scr)
        c_scr[...] = jnp.zeros_like(c_scr)

    Tc = prex_ref.shape[0]
    H = h_scr.shape[-1]

    # Small per-row vectors: cheap to bind once per grid step.
    bh = bh_ref[...]
    gh_g, gh_b = gh_ref[...], bgh_ref[...]
    gc_g, gc_b = gc_ref[...], bgc_ref[...]

    def step(i, carry):
        # forward: row = i ; backward: row = Tc - 1 - i  (process chunk reversed)
        row = i + d * (Tc - 1 - 2 * i)
        xg = prex_ref[row]                                   # (B, 4H), already LNx'd
        pre_h = jnp.dot(h_scr[...], wh_ref[...],
                        preferred_element_type=jnp.float32) + bh
        gates = xg + _layernorm(pre_h, gh_g, gh_b)
        it = jax.nn.sigmoid(gates[:, 0 * H:1 * H])
        ft = jax.nn.sigmoid(gates[:, 1 * H:2 * H])
        gt = jnp.tanh(gates[:, 2 * H:3 * H])
        ot = jax.nn.sigmoid(gates[:, 3 * H:4 * H])
        ct = ft * c_scr[...] + it * gt
        ht = ot * jnp.tanh(_layernorm(ct, gc_g, gc_b))
        h_scr[...] = ht
        c_scr[...] = ct
        out_ref[row] = ht.astype(out_ref.dtype)
        return carry

    jax.lax.fori_loop(0, Tc, step, None, unroll=True)


def _pick_time_chunk(T, max_chunk=16):
    """Largest divisor of T that is <= max_chunk (keeps grid exact, no T padding)."""
    for tc in range(min(T, max_chunk), 0, -1):
        if T % tc == 0:
            return tc
    return 1


def lnlstm_forward(x, params, hidden_size, bidirectional=True, max_time_chunk=16):
    """x: (B, T, input_size) float32 -> (B, T, hidden_size)."""
    assert bidirectional, "kernel below is wired for the bidirectional path"
    B, T, D = x.shape
    H = hidden_size // 2
    G = 4 * H
    (wx, bx, wh, bh, gx, bgx, gh, bgh, gc, bgc) = params

    # Pad batch to the f32 sublane (8); batch rows are independent so this is exact.
    B_pad = ((B + 7) // 8) * 8
    if B_pad != B:
        x = jnp.pad(x, ((0, B_pad - B), (0, 0), (0, 0)))

    # --- hoisted input projection (one big fused GEMM + LayerNorm) ---
    x_tm = jnp.transpose(x, (1, 0, 2))                     # (T, B_pad, D)
    pre_x = _input_projection(x_tm.reshape(T * B_pad, D), wx, bx, gx, bgx)
    pre_x = pre_x.reshape(T, B_pad, G)

    # --- serial recurrence over time chunks ---
    Tc = _pick_time_chunk(T, max_time_chunk)
    nc = T // Tc

    def time_block(d, c):
        # fwd consumes chunks 0..nc-1, bwd consumes nc-1..0
        return c + d * (nc - 1 - 2 * c)

    out = pl.pallas_call(
        _recurrent_kernel,
        out_shape=jax.ShapeDtypeStruct((2, T, B_pad, H), jnp.float32),
        grid_spec=pltpu.PrefetchScalarGridSpec(
            num_scalar_prefetch=0,
            grid=(2, nc),
            in_specs=[
                pl.BlockSpec((Tc, B_pad, G),
                             lambda d, c: (time_block(d, c), 0, 0)),   # pre_x chunk
                pl.BlockSpec((H, G), lambda d, c: (0, 0)),             # Wh (resident)
                pl.BlockSpec((1, G), lambda d, c: (0, 0)),             # bh
                pl.BlockSpec((1, G), lambda d, c: (0, 0)),             # LNh gamma
                pl.BlockSpec((1, G), lambda d, c: (0, 0)),             # LNh beta
                pl.BlockSpec((1, H), lambda d, c: (0, 0)),             # LNc gamma
                pl.BlockSpec((1, H), lambda d, c: (0, 0)),             # LNc beta
            ],
            out_specs=pl.BlockSpec(
                (None, Tc, B_pad, H),
                lambda d, c: (d, time_block(d, c), 0, 0)),
            scratch_shapes=[
                pltpu.VMEM((B_pad, H), jnp.float32),   # h state (per direction / core)
                pltpu.VMEM((B_pad, H), jnp.float32),   # c state
            ],
        ),
        compiler_params=pltpu.CompilerParams(
            # direction axis is independent (can split across v7x's 2 TCs);
            # time axis is the recurrence -> must be sequential.
            dimension_semantics=("parallel", "arbitrary"),
            # For realistic H (>=512) raise vmem_limit_bytes here so Wh stays
            # resident (v5e default scoped VMEM is 16 MiB).
        ),
    )(pre_x, wh, bh, gh, bgh, gc, bgc)

    out_f, out_b = out[0], out[1]                          # (T, B_pad, H) each
    res = jnp.concatenate([out_f, out_b], axis=-1)         # (T, B_pad, 2H)
    res = res[:, :B, :]
    return jnp.transpose(res, (1, 0, 2))                   # (B, T, hidden_size)


# ----------------------------------------------------------------------------
# Pure-JAX reference (replica of the PyTorch forward) and test harness
# ----------------------------------------------------------------------------
def lnlstm_reference(x, params, hidden_size):
    B, T, D = x.shape
    H = hidden_size // 2
    (wx, bx, wh, bh, gx, bgx, gh, bgh, gc, bgc) = params

    def recurrence(xt, h, c):
        gates = _layernorm(xt @ wx + bx, gx, bgx) + _layernorm(h @ wh + bh, gh, bgh)
        it, ft, gt, ot = jnp.split(gates, 4, axis=-1)
        it, ft, ot = jax.nn.sigmoid(it), jax.nn.sigmoid(ft), jax.nn.sigmoid(ot)
        gt = jnp.tanh(gt)
        ct = ft * c + it * gt
        ht = ot * jnp.tanh(_layernorm(ct, gc, bgc))
        return ht, ct

    def run(order):
        h = jnp.zeros((B, H), jnp.float32)
        c = jnp.zeros((B, H), jnp.float32)
        outs = [None] * T
        for t in order:
            h, c = recurrence(x[:, t, :], h, c)
            outs[t] = h
        return jnp.stack(outs, axis=1)  # (B, T, H)

    out_f = run(range(T))
    out_b = run(range(T - 1, -1, -1))
    return jnp.concatenate([out_f, out_b], axis=-1)


def make_params(key, input_size, hidden_size):
    H = hidden_size // 2
    G = 4 * H
    ks = jax.random.split(key, 8)
    # Linear weights stored pre-transposed: (in_features, out_features)
    wx = jax.random.normal(ks[0], (input_size, G), jnp.float32) * 0.1
    bx = jax.random.normal(ks[1], (1, G), jnp.float32) * 0.05
    wh = jax.random.normal(ks[2], (H, G), jnp.float32) * 0.1
    bh = jax.random.normal(ks[3], (1, G), jnp.float32) * 0.05
    gx = 1.0 + 0.1 * jax.random.normal(ks[4], (1, G), jnp.float32)
    bgx = 0.05 * jax.random.normal(ks[5], (1, G), jnp.float32)
    gh = 1.0 + 0.1 * jax.random.normal(ks[6], (1, G), jnp.float32)
    bgh = 0.05 * jax.random.normal(ks[7], (1, G), jnp.float32)
    gc = jnp.ones((1, H), jnp.float32)
    bgc = jnp.zeros((1, H), jnp.float32)
    return (wx, bx, wh, bh, gx, bgx, gh, bgh, gc, bgc)


if __name__ == "__main__":
    key = jax.random.PRNGKey(0)
    # Two configs: the small one from the spec, and a lane-aligned one
    # (H per direction = 128) which is the layout the kernel is tuned for.
    configs = [
        (2, 8, 32, 32),    # B, T, input_size, hidden_size  -> H = 16
        (2, 8, 32, 256),   #                                -> H = 128
    ]
    for (B, T, input_size, hidden_size) in configs:
        key, k_x, k_p = jax.random.split(key, 3)
        x = jax.random.normal(k_x, (B, T, input_size), jnp.float32)
        params = make_params(k_p, input_size, hidden_size)

        out = lnlstm_forward(x, params, hidden_size, bidirectional=True)
        out = jax.block_until_ready(out)

        ref = lnlstm_reference(x, params, hidden_size)
        assert out.shape == (B, T, hidden_size), out.shape
        err = float(jnp.abs(out - ref).max())
        assert jnp.allclose(out, ref, atol=2e-4, rtol=2e-4), err

    print("KERNEL_OK")
</pallas_src>

<mosaic_0001>
module attributes {stable_mosaic.version = 11 : i64} {
  func.func @_proj_ln_kernel(%arg0: i32, %arg1: memref<64x32xf32, #tpu.memory_space<vmem>>, %arg2: memref<32x64xf32, #tpu.memory_space<vmem>>, %arg3: memref<1x64xf32, #tpu.memory_space<vmem>>, %arg4: memref<1x64xf32, #tpu.memory_space<vmem>>, %arg5: memref<1x64xf32, #tpu.memory_space<vmem>>, %arg6: memref<64x64xf32, #tpu.memory_space<vmem>>) attributes {dimension_semantics = [#tpu.dimension_semantics<parallel>], iteration_bounds = array<i64: 1>, scalar_prefetch = 0 : i64, scratch_operands = 0 : i64, tpu.core_type = #tpu.core_type<tc>, window_params = [{transform_indices = @transform_0, window_bounds = array<i64: 64, 32>}, {pipeline_mode = #tpu.pipeline_mode<synchronous>, transform_indices = @transform_1, window_bounds = array<i64: 32, 64>}, {pipeline_mode = #tpu.pipeline_mode<synchronous>, transform_indices = @transform_2, window_bounds = array<i64: 1, 64>}, {pipeline_mode = #tpu.pipeline_mode<synchronous>, transform_indices = @transform_3, window_bounds = array<i64: 1, 64>}, {pipeline_mode = #tpu.pipeline_mode<synchronous>, transform_indices = @transform_4, window_bounds = array<i64: 1, 64>}, {transform_indices = @transform_5, window_bounds = array<i64: 64, 64>}]} {
    %c0 = arith.constant 0 : index
    %c0_0 = arith.constant 0 : index
    %0 = vector.load %arg1[%c0, %c0_0] : memref<64x32xf32, #tpu.memory_space<vmem>>, vector<64x32xf32>
    %c0_1 = arith.constant 0 : index
    %c0_2 = arith.constant 0 : index
    %1 = vector.load %arg2[%c0_1, %c0_2] : memref<32x64xf32, #tpu.memory_space<vmem>>, vector<32x64xf32>
    %cst = arith.constant dense<0.000000e+00> : vector<64x64xf32>
    %2 = tpu.matmul %0, %1, %cst {dimension_numbers = #tpu.dot_dimension_numbers<[1], [0], [0], [1], [0, 0, 1, 1], [], []>} : vector<64x32xf32>, vector<32x64xf32>, vector<64x64xf32> -> vector<64x64xf32>
    %c0_3 = arith.constant 0 : index
    %c0_4 = arith.constant 0 : index
    %3 = vector.load %arg3[%c0_3, %c0_4] : memref<1x64xf32, #tpu.memory_space<vmem>>, vector<1x64xf32>
    %4 = vector.broadcast %3 : vector<1x64xf32> to vector<64x64xf32>
    %5 = arith.addf %2, %4 : vector<64x64xf32>
    %c0_5 = arith.constant 0 : index
    %c0_6 = arith.constant 0 : index
    %6 = vector.load %arg4[%c0_5, %c0_6] : memref<1x64xf32, #tpu.memory_space<vmem>>, vector<1x64xf32>
    %c0_7 = arith.constant 0 : index
    %c0_8 = arith.constant 0 : index
    %7 = vector.load %arg5[%c0_7, %c0_8] : memref<1x64xf32, #tpu.memory_space<vmem>>, vector<1x64xf32>
    %cst_9 = arith.constant dense<0.000000e+00> : vector<64xf32>
    %8 = vector.multi_reduction <add>, %5, %cst_9 [1] : vector<64x64xf32> to vector<64xf32>
    %9 = vector.shape_cast %8 : vector<64xf32> to vector<64x1xf32>
    %cst_10 = arith.constant 6.400000e+01 : f32
    %10 = vector.broadcast %cst_10 : f32 to vector<64x1xf32>
    %11 = arith.divf %9, %10 : vector<64x1xf32>
    %12 = vector.broadcast %11 : vector<64x1xf32> to vector<64x64xf32>
    %13 = arith.subf %5, %12 : vector<64x64xf32>
    %14 = arith.mulf %13, %13 : vector<64x64xf32>
    %cst_11 = arith.constant dense<0.000000e+00> : vector<64xf32>
    %15 = vector.multi_reduction <add>, %14, %cst_11 [1] : vector<64x64xf32> to vector<64xf32>
    %16 = vector.shape_cast %15 : vector<64xf32> to vector<64x1xf32>
    %cst_12 = arith.constant 6.400000e+01 : f32
    %17 = vector.broadcast %cst_12 : f32 to vector<64x1xf32>
    %18 = arith.divf %16, %17 : vector<64x1xf32>
    %19 = vector.broadcast %11 : vector<64x1xf32> to vector<64x64xf32>
    %20 = arith.subf %5, %19 : vector<64x64xf32>
    %cst_13 = arith.constant 9.99999974E-6 : f32
    %21 = vector.broadcast %cst_13 : f32 to vector<64x1xf32>
    %22 = arith.addf %18, %21 : vector<64x1xf32>
    %23 = math.rsqrt %22 : vector<64x1xf32>
    %24 = vector.broadcast %23 : vector<64x1xf32> to vector<64x64xf32>
    %25 = arith.mulf %20, %24 : vector<64x64xf32>
    %26 = vector.broadcast %6 : vector<1x64xf32> to vector<64x64xf32>
    %27 = arith.mulf %25, %26 : vector<64x64xf32>
    %28 = vector.broadcast %7 : vector<1x64xf32> to vector<64x64xf32>
    %29 = arith.addf %27, %28 : vector<64x64xf32>
    %c0_14 = arith.constant 0 : index
    %c0_15 = arith.constant 0 : index
    %30 = vector.load %arg6[%c0_14, %c0_15] : memref<64x64xf32, #tpu.memory_space<vmem>>, vector<64x64xf32>
    tpu.vector_store %arg6[%c0_14, %c0_15], %29 {strides = array<i32>} : memref<64x64xf32, #tpu.memory_space<vmem>>, vector<64x64xf32>,
    return
  }
  func.func @transform_0(%arg0: i32) -> (i32, i32) {
    %c0_i32 = arith.constant 0 : i32
    %c0_i32_0 = arith.constant 0 : i32
    return %arg0, %c0_i32 : i32, i32
  }
  func.func @transform_1(%arg0: i32) -> (i32, i32) {
    %c0_i32 = arith.constant 0 : i32
    %c0_i32_0 = arith.constant 0 : i32
    %c0_i32_1 = arith.constant 0 : i32
    return %c0_i32, %c0_i32_0 : i32, i32
  }
  func.func @transform_2(%arg0: i32) -> (i32, i32) {
    %c0_i32 = arith.constant 0 : i32
    %c0_i32_0 = arith.constant 0 : i32
    %c0_i32_1 = arith.constant 0 : i32
    return %c0_i32, %c0_i32_0 : i32, i32
  }
  func.func @transform_3(%arg0: i32) -> (i32, i32) {
    %c0_i32 = arith.constant 0 : i32
    %c0_i32_0 = arith.constant 0 : i32
    %c0_i32_1 = arith.constant 0 : i32
    return %c0_i32, %c0_i32_0 : i32, i32
  }
  func.func @transform_4(%arg0: i32) -> (i32, i32) {
    %c0_i32 = arith.constant 0 : i32
    %c0_i32_0 = arith.constant 0 : i32
    %c0_i32_1 = arith.constant 0 : i32
    return %c0_i32, %c0_i32_0 : i32, i32
  }
  func.func @transform_5(%arg0: i32) -> (i32, i32) {
    %c0_i32 = arith.constant 0 : i32
    %c0_i32_0 = arith.constant 0 : i32
    return %arg0, %c0_i32 : i32, i32
  }
}

</mosaic_0001>

<llo_original>
// kernel: tpu_custom_call.1
$region0: #{tpu_custom_call.1}
  #allocation0 [shape = 'u32[]', space=smem, size = 0x4, offset = 0x4, fixed_abs, tag = 'smem constant byte address 0x4 - core index']
  #allocation1 [shape = 'u32[72,128]{1,0:T(1,128)}', space=vmem, size = 0x9000, scoped, tag = 'internal scratch']
  %s0 = inlined_call_operand.vmem [shape: f32[64,32], index: 0, kind: input, shape index: {}]
  %s1 = inlined_call_operand.vmem [shape: f32[32,64], index: 1, kind: input, shape index: {}]
  %s2 = inlined_call_operand.vmem [shape: f32[1,64], index: 2, kind: input, shape index: {}]
  %s3 = inlined_call_operand.vmem [shape: f32[1,64], index: 3, kind: input, shape index: {}]
  %s4 = inlined_call_operand.vmem [shape: f32[1,64], index: 4, kind: input, shape index: {}]
  %s5 = inlined_call_operand.hbm [shape: f32[64,64], index: 5, kind: output, shape index: {}]
  %s6 = sld [smem:[#allocation0]]
  $region30: #{tpu_custom_call.1} parent=0
    _
  %s8 = ssub.s32 1, %s6
  %s9 = scalar_select 0, %s8, %s6
  $region1: #{tpu_custom_call.1} parent=0
    #allocation2 [shape = 'u8[32768]{0}', space=vmem, size = 0x8000, scoped, tag = 'output window, operand 0, single buffered']
    #allocation3 [shape = 's32[1]{0}', space=sflag, size = 0x4, scoped, tag = 'scoped memory for tpu_custom_call.1']
    %10 = vsyncpa [#allocation3], 0
    // Predicated region
    $region2: #{tpu_custom_call.1} parent=1 // pred_check
      _
    $region3: #{tpu_custom_call.1} parent=1 // pred_check_branch
      %12 = sbr.rel (0) target = $region5
    $region4: #{tpu_custom_call.1} parent=1 // pred_region
      _
    $region5: #{tpu_custom_call.1} parent=1 // pred_fallthru
      _
    // Predicated region
    $region6: #{tpu_custom_call.1} parent=1 // pred_check
      _
    $region7: #{tpu_custom_call.1} parent=1 // pred_check_branch
      %14 = sbr.rel (0) target = $region9
    $region8: #{tpu_custom_call.1} parent=1 // pred_region
      _
    $region9: #{tpu_custom_call.1} parent=1 // pred_fallthru
      _
    // Predicated region
    $region10: #{tpu_custom_call.1} parent=1 // pred_check
      _
    $region11: #{tpu_custom_call.1} parent=1 // pred_check_branch
      %16 = sbr.rel (0) target = $region13
    $region12: #{tpu_custom_call.1} parent=1 // pred_region
      _
    $region13: #{tpu_custom_call.1} parent=1 // pred_fallthru
      _
    // Predicated region
    $region14: #{tpu_custom_call.1} parent=1 // pred_check
      _
    $region15: #{tpu_custom_call.1} parent=1 // pred_check_branch
      %18 = sbr.rel (0) target = $region17
    $region16: #{tpu_custom_call.1} parent=1 // pred_region
      _
    $region17: #{tpu_custom_call.1} parent=1 // pred_fallthru
      _
    // Predicated region
    $region18: #{tpu_custom_call.1} parent=1 // pred_check
      _
    $region19: #{tpu_custom_call.1} parent=1 // pred_check_branch
      %20 = sbr.rel (0) target = $region21
    $region20: #{tpu_custom_call.1} parent=1 // pred_region
      _
    $region21: #{tpu_custom_call.1} parent=1 // pred_fallthru
      _
    %v21 = vld [vmem:[%s0] sm:$0xff]
    %v22 = vld [vmem:[%s0 + $0x8] sm:$0xff]
    %v23 = vld [vmem:[%s0 + $0x10] sm:$0xff]
    %v24 = vld [vmem:[%s0 + $0x18] sm:$0xff]
    %v25 = vld [vmem:[%s0 + $0x20] sm:$0xff]
    %v26 = vld [vmem:[%s0 + $0x28] sm:$0xff]
    %v27 = vld [vmem:[%s0 + $0x30] sm:$0xff]
    %v28 = vld [vmem:[%s0 + $0x38] sm:$0xff]
    %v29 = vld [vmem:[%s1] sm:$0xff]
    %v30 = vld [vmem:[%s1 + $0x8] sm:$0xff]
    %v31 = vld [vmem:[%s1 + $0x10] sm:$0xff]
    %v32 = vld [vmem:[%s1 + $0x18] sm:$0xff]
    %v33 = vld [vmem:[%s2] sm:$0x1]
    %v35 = vperm.slane %v33, 0
    %vm37 = vcmask 261120
    %v39 = vsel %vm37, %v21, 0
    %v42 = vsel %vm37, %v22, 0
    %v45 = vsel %vm37, %v23, 0
    %v48 = vsel %vm37, %v24, 0
    %v51 = vsel %vm37, %v25, 0
    %v54 = vsel %vm37, %v26, 0
    %v57 = vsel %vm37, %v27, 0
    %v60 = vsel %vm37, %v28, 0
    %62 = vmatpush.msra.mxu0 0.0
    %63 = vmatpush.msra.mxu0 0.0
    %64 = vmatpush.msra.mxu0 0.0
    %65 = vmatpush.msra.mxu0 0.0
    %66 = vmatpush.msra.mxu0 0.0
    %67 = vmatpush.msra.mxu0 0.0
    %68 = vmatpush.msra.mxu0 0.0
    %69 = vmatpush.msra.mxu0 0.0
    %70 = vmatpush.msra.mxu0 0.0
    %71 = vmatpush.msra.mxu0 0.0
    %72 = vmatpush.msra.mxu0 0.0
    %73 = vmatpush.msra.mxu0 0.0
    %74 = vmatpush.msra.mxu0 %v32
    %75 = vmatpush.msra.mxu0 %v31
    %76 = vmatpush.msra.mxu0 %v30
    %77 = vmatpush.msra.mxu0 %v29
    %78 = vmatmul.f32.gmra.mxu0 %v39
    %v79 = vpop.f32.mrf.mxu0
    %v80 = vadd.f32 %v35, %v79
    %81 = vmatmul.f32.gmra.mxu0 %v42
    %v82 = vpop.f32.mrf.mxu0
    %v83 = vadd.f32 %v35, %v82
    %84 = vmatmul.f32.gmra.mxu0 %v45
    %v85 = vpop.f32.mrf.mxu0
    %v86 = vadd.f32 %v35, %v85
    %87 = vmatmul.f32.gmra.mxu0 %v48
    %v88 = vpop.f32.mrf.mxu0
    %v89 = vadd.f32 %v35, %v88
    %90 = vmatmul.f32.gmra.mxu0 %v51
    %v91 = vpop.f32.mrf.mxu0
    %v92 = vadd.f32 %v35, %v91
    %93 = vmatmul.f32.gmra.mxu0 %v54
    %v94 = vpop.f32.mrf.mxu0
    %v95 = vadd.f32 %v35, %v94
    %96 = vmatmul.f32.gmra.mxu0 %v57
    %v97 = vpop.f32.mrf.mxu0
    %v98 = vadd.f32 %v35, %v97
    %99 = vmatmul.f32.gmra.mxu0 %v60
    %v100 = vpop.f32.mrf.mxu0
    %v101 = vadd.f32 %v35, %v100
    %102 = vdwg.mxu0
    %v103 = vld [vmem:[%s3] sm:$0x1]
    %v104 = vld [vmem:[%s4] sm:$0x1]
    %vm105 = vcmask 523264
    %v106 = vsel %vm105, %v80, 0.0
    %107 = vadd.xlane.f32.xlu0 %v106
    %v108 = vpop.xlane.xlu0 %107
    %v109 = vsel %vm105, %v83, 0.0
    %110 = vadd.xlane.f32.xlu0 %v109
    %v111 = vpop.xlane.xlu0 %110
    %v112 = vsel %vm105, %v86, 0.0
    %113 = vadd.xlane.f32.xlu0 %v112
    %v114 = vpop.xlane.xlu0 %113
    %v115 = vsel %vm105, %v89, 0.0
    %116 = vadd.xlane.f32.xlu0 %v115
    %v117 = vpop.xlane.xlu0 %116
    %v118 = vsel %vm105, %v92, 0.0
    %119 = vadd.xlane.f32.xlu0 %v118
    %v120 = vpop.xlane.xlu0 %119
    %v121 = vsel %vm105, %v95, 0.0
    %122 = vadd.xlane.f32.xlu0 %v121
    %v123 = vpop.xlane.xlu0 %122
    %v124 = vsel %vm105, %v98, 0.0
    %125 = vadd.xlane.f32.xlu0 %v124
    %v126 = vpop.xlane.xlu0 %125
    %v127 = vsel %vm105, %v101, 0.0
    %128 = vadd.xlane.f32.xlu0 %v127
    %v129 = vpop.xlane.xlu0 %128
    %v130 = vrcp.pop 64.0
    %v131 = vmul.f32 64.0, %v130
    %v132 = vsub.f32 1.0, %v131
    %v133 = vmul.f32 %v130, %v132
    %v134 = vadd.f32 %v130, %v133
    %vm135 = vweird.f32 %v130
    %v136 = vsel %vm135, %v130, %v134
    %v137 = vmul.f32 %v108, %v136
    %v138 = vmul.f32 %v111, %v136
    %v139 = vmul.f32 %v114, %v136
    %v140 = vmul.f32 %v117, %v136
    %v141 = vmul.f32 %v120, %v136
    %v142 = vmul.f32 %v123, %v136
    %v143 = vmul.f32 %v126, %v136
    %v144 = vmul.f32 %v129, %v136
    %v145 = vsub.f32 %v80, %v137
    %v146 = vsub.f32 %v83, %v138
    %v147 = vsub.f32 %v86, %v139
    %v148 = vsub.f32 %v89, %v140
    %v149 = vsub.f32 %v92, %v141
    %v150 = vsub.f32 %v95, %v142
    %v151 = vsub.f32 %v98, %v143
    %v152 = vsub.f32 %v101, %v144
    %v153 = vmul.f32 %v145, %v145
    %v154 = vmul.f32 %v146, %v146
    %v155 = vmul.f32 %v147, %v147
    %v156 = vmul.f32 %v148, %v148
    %v157 = vmul.f32 %v149, %v149
    %v158 = vmul.f32 %v150, %v150
    %v159 = vmul.f32 %v151, %v151
    %v160 = vmul.f32 %v152, %v152
    %v161 = vsel %vm105, %v153, 0.0
    %162 = vadd.xlane.f32.xlu0 %v161
    %v163 = vpop.xlane.xlu0 %162
    %v164 = vsel %vm105, %v154, 0.0
    %165 = vadd.xlane.f32.xlu0 %v164
    %v166 = vpop.xlane.xlu0 %165
    %v167 = vsel %vm105, %v155, 0.0
    %168 = vadd.xlane.f32.xlu0 %v167
    %v169 = vpop.xlane.xlu0 %168
    %v170 = vsel %vm105, %v156, 0.0
    %171 = vadd.xlane.f32.xlu0 %v170
    %v172 = vpop.xlane.xlu0 %171
    %v173 = vsel %vm105, %v157, 0.0
    %174 = vadd.xlane.f32.xlu0 %v173
    %v175 = vpop.xlane.xlu0 %174
    %v176 = vsel %vm105, %v158, 0.0
    %177 = vadd.xlane.f32.xlu0 %v176
    %v178 = vpop.xlane.xlu0 %177
    %v179 = vsel %vm105, %v159, 0.0
    %180 = vadd.xlane.f32.xlu0 %v179
    %v181 = vpop.xlane.xlu0 %180
    %v182 = vsel %vm105, %v160, 0.0
    %183 = vadd.xlane.f32.xlu0 %v182
    %v184 = vpop.xlane.xlu0 %183
    %v185 = vmul.f32 %v163, %v136
    %v186 = vmul.f32 %v166, %v136
    %v187 = vmul.f32 %v169, %v136
    %v188 = vmul.f32 %v172, %v136
    %v189 = vmul.f32 %v175, %v136
    %v190 = vmul.f32 %v178, %v136
    %v191 = vmul.f32 %v181, %v136
    %v192 = vmul.f32 %v184, %v136
    %v193 = vadd.f32 %v185, 1e-05
    %v194 = vadd.f32 %v186, 1e-05
    %v195 = vadd.f32 %v187, 1e-05
    %v196 = vadd.f32 %v188, 1e-05
    %v197 = vadd.f32 %v189, 1e-05
    %v198 = vadd.f32 %v190, 1e-05
    %v199 = vadd.f32 %v191, 1e-05
    %v200 = vadd.f32 %v192, 1e-05
    %v201 = vrsqrt.pop %v193
    %v202 = vmul.f32 %v201, %v193
    %v203 = vmul.f32 %v202, %v201
    %v204 = vmul.f32 0.5, %v203
    %v205 = vsub.f32 1.5, %v204
    %v206 = vmul.f32 %v201, %v205
    %vm207 = vweird.f32 %v193
    %vm208 = vweird.f32 %v201
    %vm209 = vmor %vm207, %vm208
    %v210 = vsel %vm209, %v201, %v206
    %v211 = vrsqrt.pop %v194
    %v212 = vmul.f32 %v211, %v194
    %v213 = vmul.f32 %v212, %v211
    %v214 = vmul.f32 0.5, %v213
    %v215 = vsub.f32 1.5, %v214
    %v216 = vmul.f32 %v211, %v215
    %vm217 = vweird.f32 %v194
    %vm218 = vweird.f32 %v211
    %vm219 = vmor %vm217, %vm218
    %v220 = vsel %vm219, %v211, %v216
    %v221 = vrsqrt.pop %v195
    %v222 = vmul.f32 %v221, %v195
    %v223 = vmul.f32 %v222, %v221
    %v224 = vmul.f32 0.5, %v223
    %v225 = vsub.f32 1.5, %v224
    %v226 = vmul.f32 %v221, %v225
    %vm227 = vweird.f32 %v195
    %vm228 = vweird.f32 %v221
    %vm229 = vmor %vm227, %vm228
    %v230 = vsel %vm229, %v221, %v226
    %v231 = vrsqrt.pop %v196
    %v232 = vmul.f32 %v231, %v196
    %v233 = vmul.f32 %v232, %v231
    %v234 = vmul.f32 0.5, %v233
    %v235 = vsub.f32 1.5, %v234
    %v236 = vmul.f32 %v231, %v235
    %vm237 = vweird.f32 %v196
    %vm238 = vweird.f32 %v231
    %vm239 = vmor %vm237, %vm238
    %v240 = vsel %vm239, %v231, %v236
    %v241 = vrsqrt.pop %v197
    %v242 = vmul.f32 %v241, %v197
    %v243 = vmul.f32 %v242, %v241
    %v244 = vmul.f32 0.5, %v243
    %v245 = vsub.f32 1.5, %v244
    %v246 = vmul.f32 %v241, %v245
    %vm247 = vweird.f32 %v197
    %vm248 = vweird.f32 %v241
    %vm249 = vmor %vm247, %vm248
    %v250 = vsel %vm249, %v241, %v246
    %v251 = vrsqrt.pop %v198
    %v252 = vmul.f32 %v251, %v198
    %v253 = vmul.f32 %v252, %v251
    %v254 = vmul.f32 0.5, %v253
    %v255 = vsub.f32 1.5, %v254
    %v256 = vmul.f32 %v251, %v255
    %vm257 = vweird.f32 %v198
    %vm258 = vweird.f32 %v251
    %vm259 = vmor %vm257, %vm258
    %v260 = vsel %vm259, %v251, %v256
    %v261 = vrsqrt.pop %v199
    %v262 = vmul.f32 %v261, %v199
    %v263 = vmul.f32 %v262, %v261
    %v264 = vmul.f32 0.5, %v263
    %v265 = vsub.f32 1.5, %v264
    %v266 = vmul.f32 %v261, %v265
    %vm267 = vweird.f32 %v199
    %vm268 = vweird.f32 %v261
    %vm269 = vmor %vm267, %vm268
    %v270 = vsel %vm269, %v261, %v266
    %v271 = vrsqrt.pop %v200
    %v272 = vmul.f32 %v271, %v200
    %v273 = vmul.f32 %v272, %v271
    %v274 = vmul.f32 0.5, %v273
    %v275 = vsub.f32 1.5, %v274
    %v276 = vmul.f32 %v271, %v275
    %vm277 = vweird.f32 %v200
    %vm278 = vweird.f32 %v271
    %vm279 = vmor %vm277, %vm278
    %v280 = vsel %vm279, %v271, %v276
    %v281 = vmul.f32 %v145, %v210
    %v282 = vmul.f32 %v146, %v220
    %v283 = vmul.f32 %v147, %v230
    %v284 = vmul.f32 %v148, %v240
    %v285 = vmul.f32 %v149, %v250
    %v286 = vmul.f32 %v150, %v260
    %v287 = vmul.f32 %v151, %v270
    %v288 = vmul.f32 %v152, %v280
    %v290 = vperm.slane %v103, 0
    %v292 = vmul.f32 %v281, %v290
    %v293 = vmul.f32 %v282, %v290
    %v294 = vmul.f32 %v283, %v290
    %v295 = vmul.f32 %v284, %v290
    %v296 = vmul.f32 %v285, %v290
    %v297 = vmul.f32 %v286, %v290
    %v298 = vmul.f32 %v287, %v290
    %v299 = vmul.f32 %v288, %v290
    %v301 = vperm.slane %v104, 0
    %v303 = vadd.f32 %v292, %v301
    %v304 = vadd.f32 %v293, %v301
    %v305 = vadd.f32 %v294, %v301
    %v306 = vadd.f32 %v295, %v301
    %v307 = vadd.f32 %v296, %v301
    %v308 = vadd.f32 %v297, %v301
    %v309 = vadd.f32 %v298, %v301
    %v310 = vadd.f32 %v299, %v301
    %311 = vst.msk [vmem:[#allocation2] sm:$0xff] %vm105, %v303
    %312 = vst.msk [vmem:[#allocation2 + $0x8] sm:$0xff] %vm105, %v304
    %313 = vst.msk [vmem:[#allocation2 + $0x10] sm:$0xff] %vm105, %v305
    %314 = vst.msk [vmem:[#allocation2 + $0x18] sm:$0xff] %vm105, %v306
    %315 = vst.msk [vmem:[#allocation2 + $0x20] sm:$0xff] %vm105, %v307
    %316 = vst.msk [vmem:[#allocation2 + $0x28] sm:$0xff] %vm105, %v308
    %317 = vst.msk [vmem:[#allocation2 + $0x30] sm:$0xff] %vm105, %v309
    %318 = vst.msk [vmem:[#allocation2 + $0x38] sm:$0xff] %vm105, %v310
    // Predicated region
    $region22: #{tpu_custom_call.1} parent=1 // pred_check
      _
    $region23: #{tpu_custom_call.1} parent=1 // pred_check_branch
      %320 = sbr.rel (0) target = $region25
    $region24: #{tpu_custom_call.1} parent=1 // pred_region
      %322 = vsyncadd [#allocation3], 0
      %s323 = sshll.u32 [#allocation2], 4
      %s324 = int_to_ptr.vmem [resolvable:$true] %s323
      %s325 = sshll.u32 %s5, 4
      %s326 = int_to_ptr.hbm [resolvable:$true] %s325
      %331 = dma.vmem_to_hbm [thread:$0]  %s324, 1024, %s326, [#allocation3], 128, 128, 8
    $region25: #{tpu_custom_call.1} parent=1 // pred_fallthru
      _
    // Predicated region
    $region26: #{tpu_custom_call.1} parent=1 // pred_check
      _
    $region27: #{tpu_custom_call.1} parent=1 // pred_check_branch
      %333 = sbr.rel (0) target = $region29
    $region28: #{tpu_custom_call.1} parent=1 // pred_region
      %335 = dma.done [#allocation3], 1024
    $region29: #{tpu_custom_call.1} parent=1 // pred_fallthru
      _
    %336 = vsyncpa [#allocation3], 1

</llo_original>
